<compile_context>
chip_gen: v7x
topology: tpu7x:2x2x1
jax: 0.10.0
libtpu: 0.0.40
codegen_flags: <defaults>
</compile_context>

<pallas_src>
import jax
import jax.numpy as jnp
from jax import lax
from jax.experimental import pallas as pl
from jax.experimental.pallas import tpu as pltpu


# --------------------------------------------------------------------------- #
# Prologue: project + L2-normalize radar features -> bf16 r_norm              #
# --------------------------------------------------------------------------- #
def _project_normalize_kernel(x_ref, w_ref, b_ref, out_ref):
    y = jnp.dot(x_ref[...], w_ref[...],
                preferred_element_type=jnp.float32) + b_ref[...]
    # no eps, matching torch's x / x.norm() behaviour
    y = y * lax.rsqrt(jnp.sum(y * y, axis=-1, keepdims=True))
    out_ref[...] = y.astype(out_ref.dtype)


def _project_normalize(x_bf, w_bf, bias_f32, *, tile_rows):
    b, d_in = x_bf.shape
    d_out = w_bf.shape[1]
    tr = min(tile_rows, b)
    assert b % tr == 0, "batch must be divisible by the prologue row tile"
    return pl.pallas_call(
        _project_normalize_kernel,
        out_shape=jax.ShapeDtypeStruct((b, d_out), jnp.bfloat16),
        grid_spec=pltpu.PrefetchScalarGridSpec(
            num_scalar_prefetch=0,
            grid=(b // tr,),
            in_specs=[
                pl.BlockSpec((tr, d_in), lambda i: (i, 0)),
                pl.BlockSpec((d_in, d_out), lambda i: (0, 0)),
                pl.BlockSpec((1, d_out), lambda i: (0, 0)),
            ],
            out_specs=pl.BlockSpec((tr, d_out), lambda i: (i, 0)),
        ),
        compiler_params=pltpu.CompilerParams(
            dimension_semantics=("parallel",)),
    )(x_bf, w_bf, bias_f32)


# --------------------------------------------------------------------------- #
# Main kernel: optical projection + BxB similarity + dual online LSE + loss   #
# --------------------------------------------------------------------------- #
def _contrast_loss_kernel(scale_ref, optical_ref, r_norm_ref, wo_ref, bo_ref,
                          loss_ref,
                          col_ref_ref, col_sum_ref, row_acc_ref, diag_acc_ref):
    i = pl.program_id(0)
    nt = pl.num_programs(0)
    tq = optical_ref.shape[0]
    b = r_norm_ref.shape[0]

    @pl.when(i == 0)
    def _():
        col_ref_ref[...] = jnp.full_like(col_ref_ref, -jnp.inf)
        col_sum_ref[...] = jnp.zeros_like(col_sum_ref)
        row_acc_ref[...] = jnp.zeros_like(row_acc_ref)
        diag_acc_ref[...] = jnp.zeros_like(diag_acc_ref)

    # ---- project + normalize optical tile, fold logit scale in (f32 math) ---
    o = jnp.dot(optical_ref[...], wo_ref[...],
                preferred_element_type=jnp.float32) + bo_ref[...]
    o = o * (scale_ref[...] * lax.rsqrt(jnp.sum(o * o, axis=-1, keepdims=True)))
    o_bf = o.astype(jnp.bfloat16)

    # ---- logits tile = (scale * o_norm) @ r_norm.T  : bf16 MXU, f32 acc -----
    logits = lax.dot_general(o_bf, r_norm_ref[...], (((1,), (1,)), ((), ())),
                             preferred_element_type=jnp.float32)      # (tq, B)

    # ---- row-wise LSE (rows of logits_per_optical); one full-tile exp -------
    row_max = jnp.max(logits, axis=-1, keepdims=True)                 # (tq, 1)
    p = jnp.exp(logits - row_max)                                     # (tq, B)
    row_sum = jnp.sum(p, axis=-1, keepdims=True)                      # (tq, 1)
    row_lse = row_max + jnp.log(row_sum)
    row_acc_ref[...] += jnp.sum(row_lse, keepdims=True)

    # ---- diagonal (target) logits for this tile (rows globally aligned) -----
    start = pl.multiple_of(i * tq, tq)
    r_tile = r_norm_ref[pl.ds(start, tq), :].astype(jnp.float32)      # (tq, D)
    diag = jnp.sum(o_bf.astype(jnp.float32) * r_tile, axis=-1, keepdims=True)
    diag_acc_ref[...] += jnp.sum(diag, keepdims=True)

    # ---- online column-wise LSE (rows of logits_per_radar), reusing p -------
    m_ref = jnp.max(row_max, axis=0, keepdims=True)                   # (1, 1)
    w = jnp.exp(row_max - m_ref)                                      # (tq,1) <= 1
    tile_col = jnp.sum(p * w, axis=0, keepdims=True)                  # (1, B)
    ref_old = col_ref_ref[...]                                        # (1, 1)
    ref_new = jnp.maximum(ref_old, m_ref)
    col_sum_ref[...] = (col_sum_ref[...] * jnp.exp(ref_old - ref_new)
                        + tile_col * jnp.exp(m_ref - ref_new))
    col_ref_ref[...] = ref_new

    # ---- finalize ------------------------------------------------------------
    @pl.when(i == nt - 1)
    def _():
        col_lse_sum = jnp.sum(col_ref_ref[...] + jnp.log(col_sum_ref[...]),
                              keepdims=True)                           # (1, 1)
        total = row_acc_ref[...] + col_lse_sum - 2.0 * diag_acc_ref[...]
        loss_ref[...] = total * (0.5 / b)


def _vmem_limit(b, d_in, d_out, tq):
    bf16, f32 = 2, 4
    est = (2 * tq * d_in * bf16          # optical tile (double-buffered)
           + 2 * b * d_out * bf16        # resident r_norm (default 2 buffers)
           + 2 * d_in * d_out * bf16     # w_optical (default 2 buffers)
           + 2 * d_out * f32             # bias
           + (b + 8) * f32               # column-LSE scratch + scalar accs
           + 2 * tq * b * f32            # live logits + p
           + 3 * tq * d_out * f32)       # o / o_bf / r_tile intermediates
    est += 8 << 20                       # compiler internal scratch headroom
    return int(min(max(est, 32 << 20), 56 << 20))


def contrast_loss_input(radar, optical, w_radar, b_radar, w_optical, b_optical,
                        log_scale, *, tile_rows=256):
    """Pallas equivalent of ContrastLossInput.forward (world_size=1, rank=0).

    Weights are stored (in_features, out_features), i.e. torch weight.T.
    """
    b, d_in = radar.shape
    d_out = w_radar.shape[1]
    tq = min(tile_rows, b)
    assert b % tq == 0, "batch must be divisible by the row tile"
    assert (tq % 16 == 0) or (tq == b), \
        "bf16 row tile must be a multiple of 16 (sublane packing) or the full batch"
    nt = b // tq

    radar_bf = radar.astype(jnp.bfloat16)
    optical_bf = optical.astype(jnp.bfloat16)
    wr_bf = w_radar.astype(jnp.bfloat16)
    wo_bf = w_optical.astype(jnp.bfloat16)
    br = b_radar.reshape(1, -1).astype(jnp.float32)
    bo = b_optical.reshape(1, -1).astype(jnp.float32)
    # logit scale exponentiated once in the wrapper
    scale = jnp.exp(log_scale).reshape(1, 1).astype(jnp.float32)

    # prologue: normalized radar projection, kept in bf16 for the MXU
    r_norm = _project_normalize(radar_bf, wr_bf, br, tile_rows=tile_rows)

    grid_spec = pltpu.PrefetchScalarGridSpec(
        num_scalar_prefetch=0,
        grid=(nt,),
        in_specs=[
            pl.BlockSpec((1, 1), lambda i: (0, 0)),         # logit scale
            pl.BlockSpec((tq, d_in), lambda i: (i, 0)),     # optical tile
            pl.BlockSpec((b, d_out), lambda i: (0, 0)),     # r_norm (resident)
            pl.BlockSpec((d_in, d_out), lambda i: (0, 0)),  # w_optical
            pl.BlockSpec((1, d_out), lambda i: (0, 0)),     # b_optical
        ],
        out_specs=pl.BlockSpec((1, 1), lambda i: (0, 0)),
        scratch_shapes=[
            pltpu.VMEM((1, 1), jnp.float32),   # running column-LSE reference
            pltpu.VMEM((1, b), jnp.float32),   # column running sum-exp
            pltpu.VMEM((1, 1), jnp.float32),   # row-LSE accumulator
            pltpu.VMEM((1, 1), jnp.float32),   # diagonal accumulator
        ],
    )

    loss = pl.pallas_call(
        _contrast_loss_kernel,
        out_shape=jax.ShapeDtypeStruct((1, 1), jnp.float32),
        grid_spec=grid_spec,
        compiler_params=pltpu.CompilerParams(
            dimension_semantics=("arbitrary",),
            vmem_limit_bytes=_vmem_limit(b, d_in, d_out, tq)),
    )(scale, optical_bf, r_norm, wo_bf, bo)
    return loss[0, 0]


# --------------------------------------------------------------------------- #
# Pure-JAX reference (mirrors the kernel's bf16 operand rounding)             #
# --------------------------------------------------------------------------- #
def _reference(radar, optical, w_r, b_r, w_o, b_o, log_scale):
    bf = jnp.bfloat16
    radar = radar.astype(bf).astype(jnp.float32)
    optical = optical.astype(bf).astype(jnp.float32)
    w_r = w_r.astype(bf).astype(jnp.float32)
    w_o = w_o.astype(bf).astype(jnp.float32)
    hp = jax.lax.Precision.HIGHEST
    r = jnp.dot(radar, w_r, precision=hp) + b_r
    o = jnp.dot(optical, w_o, precision=hp) + b_o
    r = r / jnp.linalg.norm(r, axis=1, keepdims=True)
    o = o / jnp.linalg.norm(o, axis=1, keepdims=True)
    scale = jnp.exp(log_scale)
    # mirror the kernel's bf16 rounding of the similarity-matmul operands
    r_q = r.astype(bf).astype(jnp.float32)
    o_q = (scale * o).astype(bf).astype(jnp.float32)
    lpo = jnp.dot(o_q, r_q.T, precision=hp)
    lpr = lpo.T
    labels = jnp.arange(lpo.shape[0])

    def ce(logits):
        logp = jax.nn.log_softmax(logits, axis=-1)
        return -jnp.mean(logp[jnp.arange(logits.shape[0]), labels])

    return 0.5 * (ce(lpo) + ce(lpr))


if __name__ == "__main__":
    B = 64                # batch of feature vectors
    D_IN = 256            # projection_input  (small stand-in for 768)
    D_OUT = 256           # projection_output (small stand-in for 768)
    TILE = 16             # bf16-aligned row tile -> grid of 4 (online LSE path)

    key = jax.random.PRNGKey(0)
    k1, k2, k3, k4, k5, k6 = jax.random.split(key, 6)

    radar_features = jax.random.normal(k1, (B, D_IN), jnp.float32)
    optical_features = jax.random.normal(k2, (B, D_IN), jnp.float32)

    # Deterministic "Linear" params (stored as (in, out) == torch weight.T)
    w_radar = 0.02 * jax.random.normal(k3, (D_IN, D_OUT), jnp.float32)
    b_radar = 0.01 * jax.random.normal(k4, (D_OUT,), jnp.float32)
    w_optical = 0.02 * jax.random.normal(k5, (D_IN, D_OUT), jnp.float32)
    b_optical = 0.01 * jax.random.normal(k6, (D_OUT,), jnp.float32)
    log_scale = jnp.asarray(jnp.log(1.0 / 0.07), jnp.float32)  # nn.Parameter init

    loss = contrast_loss_input(radar_features, optical_features,
                               w_radar, b_radar, w_optical, b_optical,
                               log_scale, tile_rows=TILE)
    loss = jax.block_until_ready(loss)

    ref = _reference(radar_features, optical_features,
                     w_radar, b_radar, w_optical, b_optical, log_scale)
    assert jnp.allclose(loss, ref, rtol=5e-3, atol=5e-3), (loss, ref)

    print("KERNEL_OK")
</pallas_src>

<mosaic_0001>
module attributes {stable_mosaic.version = 11 : i64} {
  func.func @_project_normalize_kernel(%arg0: i32, %arg1: memref<16x256xbf16, #tpu.memory_space<vmem>>, %arg2: memref<256x256xbf16, #tpu.memory_space<vmem>>, %arg3: memref<1x256xf32, #tpu.memory_space<vmem>>, %arg4: memref<16x256xbf16, #tpu.memory_space<vmem>>) attributes {dimension_semantics = [#tpu.dimension_semantics<parallel>], iteration_bounds = array<i64: 4>, scalar_prefetch = 0 : i64, scratch_operands = 0 : i64, tpu.core_type = #tpu.core_type<tc>, window_params = [{transform_indices = @transform_0, window_bounds = array<i64: 16, 256>}, {pipeline_mode = #tpu.pipeline_mode<synchronous>, transform_indices = @transform_1, window_bounds = array<i64: 256, 256>}, {pipeline_mode = #tpu.pipeline_mode<synchronous>, transform_indices = @transform_2, window_bounds = array<i64: 1, 256>}, {transform_indices = @transform_3, window_bounds = array<i64: 16, 256>}]} {
    %c0 = arith.constant 0 : index
    %c0_0 = arith.constant 0 : index
    %0 = vector.load %arg1[%c0, %c0_0] : memref<16x256xbf16, #tpu.memory_space<vmem>>, vector<16x256xbf16>
    %c0_1 = arith.constant 0 : index
    %c0_2 = arith.constant 0 : index
    %1 = vector.load %arg2[%c0_1, %c0_2] : memref<256x256xbf16, #tpu.memory_space<vmem>>, vector<256x256xbf16>
    %cst = arith.constant dense<0.000000e+00> : vector<16x256xf32>
    %2 = tpu.matmul %0, %1, %cst {dimension_numbers = #tpu.dot_dimension_numbers<[1], [0], [0], [1], [0, 0, 1, 1], [], []>} : vector<16x256xbf16>, vector<256x256xbf16>, vector<16x256xf32> -> vector<16x256xf32>
    %c0_3 = arith.constant 0 : index
    %c0_4 = arith.constant 0 : index
    %3 = vector.load %arg3[%c0_3, %c0_4] : memref<1x256xf32, #tpu.memory_space<vmem>>, vector<1x256xf32>
    %4 = vector.broadcast %3 : vector<1x256xf32> to vector<16x256xf32>
    %5 = arith.addf %2, %4 : vector<16x256xf32>
    %6 = arith.mulf %5, %5 : vector<16x256xf32>
    %cst_5 = arith.constant dense<0.000000e+00> : vector<16xf32>
    %7 = vector.multi_reduction <add>, %6, %cst_5 [1] : vector<16x256xf32> to vector<16xf32>
    %8 = vector.shape_cast %7 : vector<16xf32> to vector<16x1xf32>
    %9 = math.rsqrt %8 : vector<16x1xf32>
    %10 = vector.broadcast %9 : vector<16x1xf32> to vector<16x256xf32>
    %11 = arith.mulf %5, %10 : vector<16x256xf32>
    %12 = arith.truncf %11 : vector<16x256xf32> to vector<16x256xbf16>
    %c0_6 = arith.constant 0 : index
    %c0_7 = arith.constant 0 : index
    %13 = vector.load %arg4[%c0_6, %c0_7] : memref<16x256xbf16, #tpu.memory_space<vmem>>, vector<16x256xbf16>
    tpu.vector_store %arg4[%c0_6, %c0_7], %12 {strides = array<i32>} : memref<16x256xbf16, #tpu.memory_space<vmem>>, vector<16x256xbf16>,
    return
  }
  func.func @transform_0(%arg0: i32) -> (i32, i32) {
    %c0_i32 = arith.constant 0 : i32
    %c0_i32_0 = arith.constant 0 : i32
    return %arg0, %c0_i32 : i32, i32
  }
  func.func @transform_1(%arg0: i32) -> (i32, i32) {
    %c0_i32 = arith.constant 0 : i32
    %c0_i32_0 = arith.constant 0 : i32
    %c0_i32_1 = arith.constant 0 : i32
    return %c0_i32, %c0_i32_0 : i32, i32
  }
  func.func @transform_2(%arg0: i32) -> (i32, i32) {
    %c0_i32 = arith.constant 0 : i32
    %c0_i32_0 = arith.constant 0 : i32
    %c0_i32_1 = arith.constant 0 : i32
    return %c0_i32, %c0_i32_0 : i32, i32
  }
  func.func @transform_3(%arg0: i32) -> (i32, i32) {
    %c0_i32 = arith.constant 0 : i32
    %c0_i32_0 = arith.constant 0 : i32
    return %arg0, %c0_i32 : i32, i32
  }
}

</mosaic_0001>

<llo_original>
// kernel: tpu_custom_call.1
$region0: #{tpu_custom_call.1}
  #allocation0 [shape = 'u32[]', space=smem, size = 0x4, offset = 0x4, fixed_abs, tag = 'smem constant byte address 0x4 - core index']
  #allocation1 [shape = 'u32[144,128]{1,0:T(1,128)}', space=vmem, size = 0x12000, scoped, tag = 'internal scratch']
  %s0 = inlined_call_operand.hbm [shape: bf16[64,256], index: 0, kind: input, shape index: {}]
  %s1 = inlined_call_operand.hbm [shape: bf16[256,256], index: 1, kind: input, shape index: {}]
  %s2 = inlined_call_operand.vmem [shape: f32[1,256], index: 2, kind: input, shape index: {}]
  %s3 = inlined_call_operand.hbm [shape: bf16[64,256], index: 3, kind: output, shape index: {}]
  %s4 = sld [smem:[#allocation0]]
  $region53: #{tpu_custom_call.1} parent=0
    _
  %s6 = ssub.s32 1, %s4
  %s7 = scalar_select 0, %s6, %s4
  $region1: #{tpu_custom_call.1} parent=0
    #allocation2 [shape = 'u8[16384]{0}', space=vmem, size = 0x4000, scoped, tag = 'input window, operand 0']
    #allocation3 [shape = 's32[2]{0}', space=sflag, size = 0x8, scoped, tag = 'scoped memory for tpu_custom_call.1']
    #allocation4 [shape = 's32[2]{0}', space=sflag, size = 0x8, scoped, tag = 'scoped memory for tpu_custom_call.1']
    #allocation5 [shape = 'u8[131072]{0}', space=vmem, size = 0x20000, scoped, tag = 'input window, operand 1, single buffered']
    #allocation6 [shape = 's32[1]{0}', space=sflag, size = 0x4, scoped, tag = 'scoped memory for tpu_custom_call.1']
    #allocation7 [shape = 'u8[16384]{0}', space=vmem, size = 0x4000, scoped, tag = 'output window, operand 0']
    %8 = vsyncpa [#allocation3], 0
    %s9 = scalar_lea.sflag [#allocation3], 1
    %10 = vsyncpa %s9, 0
    %11 = vsyncpa [#allocation6], 0
    %12 = vsyncpa [#allocation4], 0
    %s13 = scalar_lea.sflag [#allocation4], 1
    %14 = vsyncpa %s13, 0
    loop: start=0, step=1, limit=6
    $region2: #{tpu_custom_call.1} parent=1 // loop_pre_header
      _
    $region3: #{tpu_custom_call.1} parent=1 // loop_header
      %s16 = sphi 0, %s20
      %p17 = scmp.ge.s32.totalorder %s16, 6
      %s26 = sphi 0, %s28
      %s29 = sphi 0, %s26
      %s30 = sphi 0, %s29
      %s46 = sphi 0, %s30
      %s50 = sphi 0, %s50
      %s52 = sphi 0, %s50
      %s53 = sphi 0, %s52
      %s67 = sphi 0, %s53
      %s71 = sphi 0, %s71
      %s73 = sphi 0, %s71
      %s74 = sphi 0, %s73
      %s88 = sphi 0, %s74
      %s94 = sphi 0, %s96
      %s97 = sphi 0, %s94
      %s98 = sphi 0, %s97
      %s114 = sphi 0, %s98
    $region4: #{tpu_custom_call.1} parent=1 // loop_header_branch
      %19 = sbr.rel (%p17) target = $region8
    $region5: #{tpu_custom_call.1} parent=1 // loop_body
      %s21 = ssub.s32 %s16, 1
      %s22 = ssub.s32 %s16, 2
      %s23 = sadd.s32 %s16, 1
      %s24 = ssub.s32 %s16, %s23
      %p25 = scmp.eq.s32.totalorder %s24, 0
      %s27 = sadd.s32 %s26, 1
      %s28 = scalar_select %p25, %s26, %s27
      %p31 = pneg %p25
      %p32 = scmp.eq.s32.totalorder %s16, 3
      %p33 = por %p31, %p32
      %p34 = scmp.ne.s32.totalorder %s26, %s29
      %p35 = scmp.eq.s32.totalorder %s16, 0
      %p36 = por %p34, %p35
      %p37 = scmp.ne.s32.totalorder %s26, %s29
      %p38 = scmp.eq.s32.totalorder %s21, 3
      %p39 = por %p37, %p38
      %p40 = scmp.ne.s32.totalorder %s29, %s30
      %p41 = scmp.eq.s32.totalorder %s21, 0
      %p42 = por %p40, %p41
      %p43 = scmp.ne.s32.totalorder %s29, %s30
      %p44 = scmp.eq.s32.totalorder %s22, 3
      %p45 = por %p43, %p44
      %p47 = scmp.ne.s32.totalorder %s30, %s46
      %p48 = scmp.eq.s32.totalorder %s22, 0
      %p49 = por %p47, %p48
      %s51 = sadd.s32 %s50, 1
      %p54 = scmp.eq.s32.totalorder %s16, 3
      %p55 = scmp.ne.s32.totalorder %s50, %s52
      %p56 = scmp.eq.s32.totalorder %s16, 0
      %p57 = por %p55, %p56
      %p58 = scmp.ne.s32.totalorder %s50, %s52
      %p59 = scmp.eq.s32.totalorder %s21, 3
      %p60 = por %p58, %p59
      %p61 = scmp.ne.s32.totalorder %s52, %s53
      %p62 = scmp.eq.s32.totalorder %s21, 0
      %p63 = por %p61, %p62
      %p64 = scmp.ne.s32.totalorder %s52, %s53
      %p65 = scmp.eq.s32.totalorder %s22, 3
      %p66 = por %p64, %p65
      %p68 = scmp.ne.s32.totalorder %s53, %s67
      %p69 = scmp.eq.s32.totalorder %s22, 0
      %p70 = por %p68, %p69
      %s72 = sadd.s32 %s71, 1
      %p75 = scmp.eq.s32.totalorder %s16, 3
      %p76 = scmp.ne.s32.totalorder %s71, %s73
      %p77 = scmp.eq.s32.totalorder %s16, 0
      %p78 = por %p76, %p77
      %p79 = scmp.ne.s32.totalorder %s71, %s73
      %p80 = scmp.eq.s32.totalorder %s21, 3
      %p81 = por %p79, %p80
      %p82 = scmp.ne.s32.totalorder %s73, %s74
      %p83 = scmp.eq.s32.totalorder %s21, 0
      %p84 = por %p82, %p83
      %p85 = scmp.ne.s32.totalorder %s73, %s74
      %p86 = scmp.eq.s32.totalorder %s22, 3
      %p87 = por %p85, %p86
      %p89 = scmp.ne.s32.totalorder %s74, %s88
      %p90 = scmp.eq.s32.totalorder %s22, 0
      %p91 = por %p89, %p90
      %s92 = ssub.s32 %s16, %s23
      %p93 = scmp.eq.s32.totalorder %s92, 0
      %s95 = sadd.s32 %s94, 1
      %s96 = scalar_select %p93, %s94, %s95
      %p99 = pneg %p93
      %p100 = scmp.eq.s32.totalorder %s16, 3
      %p101 = por %p99, %p100
      %p102 = scmp.ne.s32.totalorder %s94, %s97
      %p103 = scmp.eq.s32.totalorder %s16, 0
      %p104 = por %p102, %p103
      %p105 = scmp.ne.s32.totalorder %s94, %s97
      %p106 = scmp.eq.s32.totalorder %s21, 3
      %p107 = por %p105, %p106
      %p108 = scmp.ne.s32.totalorder %s97, %s98
      %p109 = scmp.eq.s32.totalorder %s21, 0
      %p110 = por %p108, %p109
      %p111 = scmp.ne.s32.totalorder %s97, %s98
      %p112 = scmp.eq.s32.totalorder %s22, 3
      %p113 = por %p111, %p112
      %p115 = scmp.ne.s32.totalorder %s98, %s114
      %p116 = scmp.eq.s32.totalorder %s22, 0
      %p117 = por %p115, %p116
      %p118 = scmp.le.s32.totalorder 1, %s16
      %p119 = scmp.lt.s32.totalorder %s16, 5
      %p120 = pnand %p118, %p119
      %p121 = pneg %p120
      // Predicated region
      $region9: #{tpu_custom_call.1} parent=5 // pred_check
        _
      $region10: #{tpu_custom_call.1} parent=5 // pred_check_branch
        %123 = sbr.rel (%p120) target = $region12
      $region11: #{tpu_custom_call.1} parent=5 // pred_region
        %s124 = ssub.s32 %s16, 1
        // Predicated region
        $region13: #{tpu_custom_call.1} parent=11 // pred_check
          %p125 = pneg %p63
        $region14: #{tpu_custom_call.1} parent=11 // pred_check_branch
          %127 = sbr.rel (%p125) target = $region16
        $region15: #{tpu_custom_call.1} parent=11 // pred_region
          %s129 = ssub.s32 4096, 4096
          %130 = vsyncadd [#allocation6], %s129
          %s131 = sshll.u32 [#allocation5], 4
          %s132 = int_to_ptr.vmem [resolvable:$true] %s131
          %137 = dma.hbm_to_vmem [thread:$0]  %s1, 4096, %s132, [#allocation6], 128, 128, 8
        $region16: #{tpu_custom_call.1} parent=11 // pred_fallthru
          _
        // Predicated region
        $region17: #{tpu_custom_call.1} parent=11 // pred_check
          %p138 = pneg %p84
        $region18: #{tpu_custom_call.1} parent=11 // pred_check_branch
          %140 = sbr.rel (%p138) target = $region20
        $region19: #{tpu_custom_call.1} parent=11 // pred_region
          _
        $region20: #{tpu_custom_call.1} parent=11 // pred_fallthru
          _
      $region12: #{tpu_custom_call.1} parent=5 // pred_fallthru
        _
      %p141 = scmp.lt.s32.totalorder %s16, 4
      // Predicated region
      $region21: #{tpu_custom_call.1} parent=5 // pred_check
        %p142 = pneg %p141
      $region22: #{tpu_custom_call.1} parent=5 // pred_check_branch
        %144 = sbr.rel (%p142) target = $region24
      $region23: #{tpu_custom_call.1} parent=5 // pred_region
        // Predicated region
        $region25: #{tpu_custom_call.1} parent=23 // pred_check
          %p145 = pneg %p36
        $region26: #{tpu_custom_call.1} parent=23 // pred_check_branch
          %147 = sbr.rel (%p145) target = $region28
        $region27: #{tpu_custom_call.1} parent=23 // pred_region
          %s148 = sand.u32 %s26, 1
          %s149 = scalar_lea.sflag [#allocation3], %s148
          %s150 = sand.u32 %s26, 1
          %s151 = smul.addr %s150, 16
          %s152 = scalar_lea.vmem [#allocation2], %s151
          %s153 = smul.u32 2, %s16
          %s155 = ssub.s32 256, 256
          %156 = vsyncadd %s149, %s155
          %s157 = smul.addr %s153, 2
          %s158 = smul.addr %s157, 64
          %s159 = scalar_lea.hbm %s0, %s158
          %s160 = sshll.u32 %s152, 4
          %s161 = int_to_ptr.vmem [resolvable:$true] %s160
          %166 = dma.hbm_to_vmem [thread:$0]  %s159, 256, %s161, %s149, 128, 128, 8
        $region28: #{tpu_custom_call.1} parent=23 // pred_fallthru
          _
      $region24: #{tpu_custom_call.1} parent=5 // pred_fallthru
        _
      %p167 = scmp.le.s32.totalorder 1, %s16
      %p168 = scmp.lt.s32.totalorder %s16, 5
      %p169 = pnand %p167, %p168
      %p170 = pneg %p169
      // Predicated region
      $region29: #{tpu_custom_call.1} parent=5 // pred_check
        _
      $region30: #{tpu_custom_call.1} parent=5 // pred_check_branch
        %172 = sbr.rel (%p169) target = $region32
      $region31: #{tpu_custom_call.1} parent=5 // pred_region
        %s173 = ssub.s32 %s16, 1
        %s174 = sand.u32 %s29, 1
        %s175 = scalar_lea.sflag [#allocation3], %s174
        %s176 = sand.u32 %s29, 1
        %s177 = smul.addr %s176, 16
        %s178 = scalar_lea.vmem [#allocation2], %s177
        // Predicated region
        $region33: #{tpu_custom_call.1} parent=31 // pred_check
          %p179 = pneg %p42
        $region34: #{tpu_custom_call.1} parent=31 // pred_check_branch
          %181 = sbr.rel (%p179) target = $region36
        $region35: #{tpu_custom_call.1} parent=31 // pred_region
          %182 = dma.done %s175, 256
        $region36: #{tpu_custom_call.1} parent=31 // pred_fallthru
          _
        // Predicated region
        $region37: #{tpu_custom_call.1} parent=31 // pred_check
          %p183 = pneg %p63
        $region38: #{tpu_custom_call.1} parent=31 // pred_check_branch
          %185 = sbr.rel (%p183) target = $region40
        $region39: #{tpu_custom_call.1} parent=31 // pred_region
          %186 = dma.done [#allocation6], 4096
        $region40: #{tpu_custom_call.1} parent=31 // pred_fallthru
          _
        %s187 = sand.u32 %s29, 1
        %s188 = scalar_lea.sflag [#allocation3], %s187
        %s189 = sand.u32 %s29, 1
        %s190 = smul.addr %s189, 16
        %s191 = scalar_lea.vmem [#allocation2], %s190
        %p192 = pneg %p42
        %p193 = pneg %p39
        %p194 = pneg %p63
        %p195 = pneg %p60
        %p196 = pneg %p84
        %p197 = pneg %p81
        %p198 = pneg %p110
        %p199 = pneg %p107
        %s200 = sand.u32 %s97, 1
        %s201 = scalar_lea.sflag [#allocation4], %s200
        %s202 = sand.u32 %s97, 1
        %s203 = smul.addr %s202, 16
        %s204 = scalar_lea.vmem [#allocation7], %s203
        %s205 = smul.u32 2, %s21
        %s206 = smul.u32 2, %s21
        %v207 = vld [vmem:[%s178] sm:$0xff]
        %v208 = vld [vmem:[%s178 + $0x8] sm:$0xff]
        %v209 = vld [vmem:[#allocation5] sm:$0xff]
        %v210 = vld [vmem:[#allocation5 + $0x8] sm:$0xff]
        %v211 = vld [vmem:[#allocation5 + $0x10] sm:$0xff]
        %v212 = vld [vmem:[#allocation5 + $0x18] sm:$0xff]
        %v213 = vld [vmem:[#allocation5 + $0x20] sm:$0xff]
        %v214 = vld [vmem:[#allocation5 + $0x28] sm:$0xff]
        %v215 = vld [vmem:[#allocation5 + $0x30] sm:$0xff]
        %v216 = vld [vmem:[#allocation5 + $0x38] sm:$0xff]
        %v217 = vld [vmem:[#allocation5 + $0x40] sm:$0xff]
        %v218 = vld [vmem:[#allocation5 + $0x48] sm:$0xff]
        %v219 = vld [vmem:[#allocation5 + $0x50] sm:$0xff]
        %v220 = vld [vmem:[#allocation5 + $0x58] sm:$0xff]
        %v221 = vld [vmem:[#allocation5 + $0x60] sm:$0xff]
        %v222 = vld [vmem:[#allocation5 + $0x68] sm:$0xff]
        %v223 = vld [vmem:[#allocation5 + $0x70] sm:$0xff]
        %v224 = vld [vmem:[#allocation5 + $0x78] sm:$0xff]
        %v225 = vld [vmem:[#allocation5 + $0x80] sm:$0xff]
        %v226 = vld [vmem:[#allocation5 + $0x88] sm:$0xff]
        %v227 = vld [vmem:[#allocation5 + $0x90] sm:$0xff]
        %v228 = vld [vmem:[#allocation5 + $0x98] sm:$0xff]
        %v229 = vld [vmem:[#allocation5 + $0xa0] sm:$0xff]
        %v230 = vld [vmem:[#allocation5 + $0xa8] sm:$0xff]
        %v231 = vld [vmem:[#allocation5 + $0xb0] sm:$0xff]
        %v232 = vld [vmem:[#allocation5 + $0xb8] sm:$0xff]
        %v233 = vld [vmem:[#allocation5 + $0xc0] sm:$0xff]
        %v234 = vld [vmem:[#allocation5 + $0xc8] sm:$0xff]
        %v235 = vld [vmem:[#allocation5 + $0xd0] sm:$0xff]
        %v236 = vld [vmem:[#allocation5 + $0xd8] sm:$0xff]
        %v237 = vld [vmem:[#allocation5 + $0xe0] sm:$0xff]
        %v238 = vld [vmem:[#allocation5 + $0xe8] sm:$0xff]
        %v239 = vld [vmem:[#allocation5 + $0xf0] sm:$0xff]
        %v240 = vld [vmem:[#allocation5 + $0xf8] sm:$0xff]
        %v241 = vld [vmem:[%s2] sm:$0x3]
        %v243 = vlaneseq
        %v244 = vshrl.u32 %v243, 7
        %v245 = vsub.s32 0, %v244
        %v246 = vrot.slane %v241, %v245
        %v247 = vlaneseq
        %v248 = vshrl.u32 %v247, 7
        %v249 = vsub.s32 1, %v248
        %v250 = vrot.slane %v241, %v249
        %v255 = vunpack.c.l.b16 %v207
        %v256 = vunpack.c.h.b16 %v207
        %v257 = vunpack.c.l.b16 %v208
        %v258 = vunpack.c.h.b16 %v208
        %v259 = vpack.c.b16 %v257, %v255
        %v260 = vpack.c.b16 %v258, %v256
        %v295 = vunpack.c.l.b16 %v209
        %v296 = vunpack.c.h.b16 %v209
        %v297 = vunpack.c.l.b16 %v210
        %v298 = vunpack.c.h.b16 %v210
        %v299 = vunpack.c.l.b16 %v211
        %v300 = vunpack.c.h.b16 %v211
        %v301 = vunpack.c.l.b16 %v212
        %v302 = vunpack.c.h.b16 %v212
        %v303 = vunpack.c.l.b16 %v213
        %v304 = vunpack.c.h.b16 %v213
        %v305 = vunpack.c.l.b16 %v214
        %v306 = vunpack.c.h.b16 %v214
        %v307 = vunpack.c.l.b16 %v215
        %v308 = vunpack.c.h.b16 %v215
        %v309 = vunpack.c.l.b16 %v216
        %v310 = vunpack.c.h.b16 %v216
        %v311 = vunpack.c.l.b16 %v217
        %v312 = vunpack.c.h.b16 %v217
        %v313 = vunpack.c.l.b16 %v218
        %v314 = vunpack.c.h.b16 %v218
        %v315 = vunpack.c.l.b16 %v219
        %v316 = vunpack.c.h.b16 %v219
        %v317 = vunpack.c.l.b16 %v220
        %v318 = vunpack.c.h.b16 %v220
        %v319 = vunpack.c.l.b16 %v221
        %v320 = vunpack.c.h.b16 %v221
        %v321 = vunpack.c.l.b16 %v222
        %v322 = vunpack.c.h.b16 %v222
        %v323 = vunpack.c.l.b16 %v223
        %v324 = vunpack.c.h.b16 %v223
        %v325 = vunpack.c.l.b16 %v224
        %v326 = vunpack.c.h.b16 %v224
        %v327 = vunpack.c.l.b16 %v225
        %v328 = vunpack.c.h.b16 %v225
        %v329 = vunpack.c.l.b16 %v226
        %v330 = vunpack.c.h.b16 %v226
        %v331 = vunpack.c.l.b16 %v227
        %v332 = vunpack.c.h.b16 %v227
        %v333 = vunpack.c.l.b16 %v228
        %v334 = vunpack.c.h.b16 %v228
        %v335 = vunpack.c.l.b16 %v229
        %v336 = vunpack.c.h.b16 %v229
        %v337 = vunpack.c.l.b16 %v230
        %v338 = vunpack.c.h.b16 %v230
        %v339 = vunpack.c.l.b16 %v231
        %v340 = vunpack.c.h.b16 %v231
        %v341 = vunpack.c.l.b16 %v232
        %v342 = vunpack.c.h.b16 %v232
        %v343 = vunpack.c.l.b16 %v233
        %v344 = vunpack.c.h.b16 %v233
        %v345 = vunpack.c.l.b16 %v234
        %v346 = vunpack.c.h.b16 %v234
        %v347 = vunpack.c.l.b16 %v235
        %v348 = vunpack.c.h.b16 %v235
        %v349 = vunpack.c.l.b16 %v236
        %v350 = vunpack.c.h.b16 %v236
        %v351 = vunpack.c.l.b16 %v237
        %v352 = vunpack.c.h.b16 %v237
        %v353 = vunpack.c.l.b16 %v238
        %v354 = vunpack.c.h.b16 %v238
        %v355 = vunpack.c.l.b16 %v239
        %v356 = vunpack.c.h.b16 %v239
        %v357 = vunpack.c.l.b16 %v240
        %v358 = vunpack.c.h.b16 %v240
        %v359 = vpack.c.b16 %v297, %v295
        %v360 = vpack.c.b16 %v298, %v296
        %v361 = vpack.c.b16 %v301, %v299
        %v362 = vpack.c.b16 %v302, %v300
        %v363 = vpack.c.b16 %v305, %v303
        %v364 = vpack.c.b16 %v306, %v304
        %v365 = vpack.c.b16 %v309, %v307
        %v366 = vpack.c.b16 %v310, %v308
        %v367 = vpack.c.b16 %v313, %v311
        %v368 = vpack.c.b16 %v314, %v312
        %v369 = vpack.c.b16 %v317, %v315
        %v370 = vpack.c.b16 %v318, %v316
        %v371 = vpack.c.b16 %v321, %v319
        %v372 = vpack.c.b16 %v322, %v320
        %v373 = vpack.c.b16 %v325, %v323
        %v374 = vpack.c.b16 %v326, %v324
        %v375 = vpack.c.b16 %v329, %v327
        %v376 = vpack.c.b16 %v330, %v328
        %v377 = vpack.c.b16 %v333, %v331
        %v378 = vpack.c.b16 %v334, %v332
        %v379 = vpack.c.b16 %v337, %v335
        %v380 = vpack.c.b16 %v338, %v336
        %v381 = vpack.c.b16 %v341, %v339
        %v382 = vpack.c.b16 %v342, %v340
        %v383 = vpack.c.b16 %v345, %v343
        %v384 = vpack.c.b16 %v346, %v344
        %v385 = vpack.c.b16 %v349, %v347
        %v386 = vpack.c.b16 %v350, %v348
        %v387 = vpack.c.b16 %v353, %v351
        %v388 = vpack.c.b16 %v354, %v352
        %v389 = vpack.c.b16 %v357, %v355
        %v390 = vpack.c.b16 %v358, %v356
        %423 = vmatprep.subr.bf16.mxu0 %v360
        %424 = vmatpush1.bf16.msra.mxu0 %v359
        %425 = vmatprep.subr.bf16.mxu0 %v362
        %426 = vmatpush1.bf16.msra.mxu0 %v361
        %427 = vmatprep.subr.bf16.mxu0 %v364
        %428 = vmatpush1.bf16.msra.mxu0 %v363
        %429 = vmatprep.subr.bf16.mxu0 %v366
        %430 = vmatpush1.bf16.msra.mxu0 %v365
        %431 = vmatprep.subr.bf16.mxu0 %v368
        %432 = vmatpush1.bf16.msra.mxu0 %v367
        %433 = vmatprep.subr.bf16.mxu0 %v370
        %434 = vmatpush1.bf16.msra.mxu0 %v369
        %435 = vmatprep.subr.bf16.mxu0 %v372
        %436 = vmatpush1.bf16.msra.mxu0 %v371
        %437 = vmatprep.subr.bf16.mxu0 %v374
        %438 = vmatpush1.bf16.msra.mxu0 %v373
        %439 = vmatprep.subr.bf16.mxu0 %v376
        %440 = vmatpush1.bf16.msra.mxu0 %v375
        %441 = vmatprep.subr.bf16.mxu0 %v378
        %442 = vmatpush1.bf16.msra.mxu0 %v377
        %443 = vmatprep.subr.bf16.mxu0 %v380
        %444 = vmatpush1.bf16.msra.mxu0 %v379
        %445 = vmatprep.subr.bf16.mxu0 %v382
        %446 = vmatpush1.bf16.msra.mxu0 %v381
        %447 = vmatprep.subr.bf16.mxu0 %v384
        %448 = vmatpush1.bf16.msra.mxu0 %v383
        %449 = vmatprep.subr.bf16.mxu0 %v386
        %450 = vmatpush1.bf16.msra.mxu0 %v385
        %451 = vmatprep.subr.bf16.mxu0 %v388
        %452 = vmatpush1.bf16.msra.mxu0 %v387
        %453 = vmatprep.subr.bf16.mxu0 %v390
        %454 = vmatpush1.bf16.msra.mxu0 %v389
        %455 = vmatprep.mubr.bf16.mxu0 %v260
        %456 = vmatmul.mubr.bf16.gmra.mrb[0].mxu0 %v259
        %v457 = vpop.f32.mrb[0].mxu0
        %v458 = vadd.f32 %v246, %v457
        %v459 = vpop.f32.mrb[0].mxu0
        %v460 = vadd.f32 %v250, %v459
        %v461 = vpop.f32.mrb[0].mxu0
        %v462 = vadd.f32 %v246, %v461
        %v463 = vpop.f32.mrb[0].mxu0
        %v464 = vadd.f32 %v250, %v463
        %465 = vdwg.mxu0
        %v466 = vmul.f32 %v458, %v458
        %v467 = vmul.f32 %v460, %v460
        %v468 = vmul.f32 %v462, %v462
        %v469 = vmul.f32 %v464, %v464
        %v470 = vadd.f32 %v466, %v467
        %471 = vadd.xlane.f32.xlu0 %v470
        %v472 = vpop.xlane.xlu0 %471
        %v473 = vadd.f32 %v468, %v469
        %474 = vadd.xlane.f32.xlu0 %v473
        %v475 = vpop.xlane.xlu0 %474
        %v476 = vrsqrt.pop %v472
        %v477 = vrsqrt.pop %v475
        %v478 = vmul.f32 %v458, %v476
        %v479 = vmul.f32 %v460, %v476
        %v480 = vmul.f32 %v462, %v477
        %v481 = vmul.f32 %v464, %v477
        %v482 = vpack.c.bf16 %v480, %v478
        %v483 = vpack.c.bf16 %v481, %v479
        %v486 = vunpack.c.l.b16 %v482
        %v487 = vunpack.c.l.b16 %v483
        %v488 = vunpack.c.h.b16 %v482
        %v489 = vunpack.c.h.b16 %v483
        %v490 = vpack.c.b16 %v487, %v486
        %v491 = vpack.c.b16 %v489, %v488
        %494 = vst [vmem:[%s204] sm:$0xff] %v490
        %495 = vst [vmem:[%s204 + $0x8] sm:$0xff] %v491
        %s496 = sand.u32 %s97, 1
        %s497 = scalar_lea.sflag [#allocation4], %s496
        %s498 = sand.u32 %s97, 1
        %s499 = smul.addr %s498, 16
        %s500 = scalar_lea.vmem [#allocation7], %s499
        // Predicated region
        $region41: #{tpu_custom_call.1} parent=31 // pred_check
          %p501 = pneg %p107
        $region42: #{tpu_custom_call.1} parent=31 // pred_check_branch
          %503 = sbr.rel (%p501) target = $region44
        $region43: #{tpu_custom_call.1} parent=31 // pred_region
          %s504 = smul.u32 2, %s21
          %s506 = ssub.s32 256, 256
          %507 = vsyncadd %s497, %s506
          %s508 = smul.addr %s504, 2
          %s509 = smul.addr %s508, 64
          %s510 = scalar_lea.hbm %s3, %s509
          %s511 = sshll.u32 %s500, 4
          %s512 = int_to_ptr.vmem [resolvable:$true] %s511
          %517 = dma.vmem_to_hbm [thread:$0]  %s512, 256, %s510, %s497, 128, 128, 8
        $region44: #{tpu_custom_call.1} parent=31 // pred_fallthru
          _
      $region32: #{tpu_custom_call.1} parent=5 // pred_fallthru
        _
      %p518 = scmp.le.s32.totalorder 2, %s16
      // Predicated region
      $region45: #{tpu_custom_call.1} parent=5 // pred_check
        %p519 = pneg %p518
      $region46: #{tpu_custom_call.1} parent=5 // pred_check_branch
        %521 = sbr.rel (%p519) target = $region48
      $region47: #{tpu_custom_call.1} parent=5 // pred_region
        %s522 = ssub.s32 %s16, 2
        // Predicated region
        $region49: #{tpu_custom_call.1} parent=47 // pred_check
          %p523 = pneg %p113
        $region50: #{tpu_custom_call.1} parent=47 // pred_check_branch
          %525 = sbr.rel (%p523) target = $region52
        $region51: #{tpu_custom_call.1} parent=47 // pred_region
          %s526 = sand.u32 %s98, 1
          %s527 = scalar_lea.sflag [#allocation4], %s526
          %s528 = sand.u32 %s98, 1
          %s529 = smul.addr %s528, 16
          %s530 = scalar_lea.vmem [#allocation7], %s529
          %531 = dma.done %s527, 256
        $region52: #{tpu_custom_call.1} parent=47 // pred_fallthru
          _
      $region48: #{tpu_custom_call.1} parent=5 // pred_fallthru
        _
    $region6: #{tpu_custom_call.1} parent=1 // loop_footer
      %s20 = sadd.s32 1, %s16
    $region7: #{tpu_custom_call.1} parent=1 // loop_footer_branch
      %15 = sbr.rel target = $region3
    $region8: #{tpu_custom_call.1} parent=1 // loop_exit
      _
    %532 = vsyncpa [#allocation3], 1
    %s533 = scalar_lea.sflag [#allocation3], 1
    %534 = vsyncpa %s533, 1
    %535 = vsyncpa [#allocation6], 1
    %536 = vsyncpa [#allocation4], 1
    %s537 = scalar_lea.sflag [#allocation4], 1
    %538 = vsyncpa %s537, 1

</llo_original>
